<compile_context>
chip_gen: v7x
topology: tpu7x:2x2x1
jax: 0.10.0
libtpu: 0.0.40
codegen_flags: <defaults>
</compile_context>

<pallas_src>
import jax
import jax.numpy as jnp
from jax.experimental import pallas as pl
from jax.experimental.pallas import tpu as pltpu

NZ = 8        # nz
POWER = 6     # power
NDF = 16      # ndf
BATCH = 8

D1, D2, D3 = 4 * NDF, 2 * NDF, NDF          # 64, 32, 16
FEAT = (POWER - 1) * NZ                     # 40  (x^0 folded into bias)
W_ROWS = D1 + D2 + D3                       # 112
V_ROWS = 136                                # 64+32+16 biases + 16 w4 + 1 b4, padded to 8
B_TILE = 256                                # batch tile (lanes); multiple of 128

_EPS = 1e-5   # nn.BatchNorm1d default eps


# ----------------------------------------------------------------------------- kernel
def f_cifar10_kernel(x_ref, w_ref, v_ref, o_ref):
    # x_ref: (NZ, B_TILE)  -- batch in lanes
    # w_ref: (112, 128)    -- [W1^T | W2^T | W3^T] row-stacked, lane-padded, VMEM-resident
    # v_ref: (136, 1)      -- [b1 ; b2 ; b3 ; w4 ; b4] as columns, VMEM-resident
    # o_ref: (1, B_TILE)   -- lane-dense sigmoid output
    x = x_ref[...]                                           # (NZ, Bt)

    # Powers x^1 .. x^(POWER-1), stacked along sublanes at 8-row tile boundaries.
    feats = [x]
    xp = x
    for _ in range(POWER - 2):                               # static unrolled vmuls
        xp = xp * x
        feats.append(xp)
    feat = jnp.concatenate(feats, axis=0)                    # (FEAT=40, Bt)

    # Layer 1: (64, 40) @ (40, Bt) + b1   [BN + bias + x^0 term folded]
    h = jnp.dot(w_ref[0:D1, 0:FEAT], feat,
                preferred_element_type=jnp.float32) + v_ref[0:D1, :]
    h = jnp.maximum(h, 0.1 * h)                              # LeakyReLU(0.1); Dropout=id

    # Layer 2: (32, 64) @ (64, Bt) + b2
    h = jnp.dot(w_ref[D1:D1 + D2, 0:D1], h,
                preferred_element_type=jnp.float32) + v_ref[D1:D1 + D2, :]
    h = jnp.maximum(h, 0.1 * h)

    # Layer 3: (16, 32) @ (32, Bt) + b3
    h = jnp.dot(w_ref[D1 + D2:W_ROWS, 0:D2], h,
                preferred_element_type=jnp.float32) + v_ref[D1 + D2:W_ROWS, :]
    h = jnp.maximum(h, 0.1 * h)

    # Final (ndf -> 1) layer: broadcast-mul + sublane reduce (skip an M=1 MXU pass).
    w4 = v_ref[W_ROWS:W_ROWS + D3, :]                        # (16, 1)
    b4 = v_ref[W_ROWS + D3:W_ROWS + D3 + 1, :]               # (1, 1)
    logit = jnp.sum(h * w4, axis=0, keepdims=True) + b4      # (1, Bt), lane-dense
    o_ref[...] = jax.nn.sigmoid(logit)


# ----------------------------------------------------------------------------- wrapper
def f_cifar10_forward(x, packed, b_tile=B_TILE):
    """x: (B, NZ) f32; packed: (weight_slab, vector_slab).  Returns (B,) sigmoid probs."""
    W, V = packed
    B = x.shape[0]
    n_tiles = pl.cdiv(B, b_tile)
    B_pad = n_tiles * b_tile
    # Batch-in-lanes: present x as (NZ, B_pad); padding columns are zeros (sliced off).
    xT = jnp.zeros((NZ, B_pad), jnp.float32).at[:, :B].set(x.T)

    out = pl.pallas_call(
        f_cifar10_kernel,
        out_shape=jax.ShapeDtypeStruct((1, B_pad), jnp.float32),
        grid_spec=pltpu.PrefetchScalarGridSpec(
            num_scalar_prefetch=0,
            grid=(n_tiles,),
            in_specs=[
                pl.BlockSpec((NZ, b_tile), lambda i: (0, i)),        # x tile along lanes
                pl.BlockSpec((W_ROWS, 128), lambda i: (0, 0)),       # weights: VMEM-resident
                pl.BlockSpec((V_ROWS, 1), lambda i: (0, 0)),         # biases : VMEM-resident
            ],
            out_specs=pl.BlockSpec((1, b_tile), lambda i: (0, i)),   # lane-dense output
        ),
        compiler_params=pltpu.CompilerParams(
            dimension_semantics=("parallel",),        # v7x: both TensorCores get tiles
            vmem_limit_bytes=8 * 1024 * 1024,         # tiny footprint, explicit for v7x
        ),
    )(xT, W, V)
    return out[0, :B]


# -------------------------------------------------------------------- parameter prep
def init_params(key, nz=NZ, power=POWER, ndf=NDF):
    """Raw module parameters (torch-layout analog, weights stored (in, out))."""
    dims = [(nz * power, ndf * 4), (ndf * 4, ndf * 2), (ndf * 2, ndf), (ndf, 1)]
    params = []
    for li, (din, dout) in enumerate(dims):
        key, kw, kb, kg, kbe, km, kv = jax.random.split(key, 7)
        bound = 1.0 / jnp.sqrt(din)
        Wl = jax.random.uniform(kw, (din, dout), jnp.float32, -bound, bound)
        bl = jax.random.uniform(kb, (1, dout), jnp.float32, -bound, bound)
        params += [Wl, bl]
        if li < 3:  # BatchNorm1d after the first three Linear layers
            gamma = jax.random.uniform(kg, (1, dout), jnp.float32, 0.5, 1.5)
            beta = jax.random.uniform(kbe, (1, dout), jnp.float32, -0.5, 0.5)
            rmean = jax.random.uniform(km, (1, dout), jnp.float32, -0.5, 0.5)
            rvar = jax.random.uniform(kv, (1, dout), jnp.float32, 0.5, 1.5)
            params += [gamma, beta, rmean, rvar]
    return params


def prepare_params(params, nz=NZ):
    """One-time offline fold + pack:
       BN + bias folded into weights, x^0 term folded into b1, weights transposed to
       (dout, din), then packed into one weight slab (112,128) and one vector slab (136,1)."""
    (w1, b1, g1, be1, m1, v1,
     w2, b2, g2, be2, m2, v2,
     w3, b3, g3, be3, m3, v3,
     w4, b4) = params

    def fold_bn(w, b, g, be, m, v):
        s = g * jax.lax.rsqrt(v + _EPS)          # (1, dout)
        return w * s, (b - m) * s + be

    w1f, b1f = fold_bn(w1, b1, g1, be1, m1, v1)              # (48,64), (1,64)
    b1f = b1f + jnp.sum(w1f[:nz, :], axis=0, keepdims=True)  # fold x^0 rows into bias
    w1f = w1f[nz:, :]                                        # (40,64)
    w2f, b2f = fold_bn(w2, b2, g2, be2, m2, v2)              # (64,32), (1,32)
    w3f, b3f = fold_bn(w3, b3, g3, be3, m3, v3)              # (32,16), (1,16)

    # Weight slab: row-stacked transposed weights, zero-padded to 128 lanes.
    W = jnp.zeros((W_ROWS, 128), jnp.float32)
    W = W.at[0:D1, 0:FEAT].set(w1f.T)                        # (64,40)
    W = W.at[D1:D1 + D2, 0:D1].set(w2f.T)                    # (32,64)
    W = W.at[D1 + D2:W_ROWS, 0:D2].set(w3f.T)                # (16,32)

    # Vector slab: biases / final weight / final bias as a single column.
    V = jnp.zeros((V_ROWS, 1), jnp.float32)
    V = V.at[0:D1, 0].set(b1f[0])
    V = V.at[D1:D1 + D2, 0].set(b2f[0])
    V = V.at[D1 + D2:W_ROWS, 0].set(b3f[0])
    V = V.at[W_ROWS:W_ROWS + D3, 0].set(w4[:, 0])
    V = V.at[W_ROWS + D3, 0].set(b4[0, 0])

    return jax.device_put(W), jax.device_put(V)


# ----------------------------------------------------------------------------- reference
def reference_forward(x, params):
    """Pure-JAX reference mirroring the torch module (eval mode)."""
    (w1, b1, g1, be1, m1, v1,
     w2, b2, g2, be2, m2, v2,
     w3, b3, g3, be3, m3, v3,
     w4, b4) = params
    feat = jnp.concatenate([x ** i for i in range(POWER)], axis=1)

    def bn(h, g, be, m, v):
        return (h - m) / jnp.sqrt(v + _EPS) * g + be

    def lrelu(h):
        return jnp.where(h > 0, h, 0.1 * h)

    h = lrelu(bn(feat @ w1 + b1, g1, be1, m1, v1))
    h = lrelu(bn(h @ w2 + b2, g2, be2, m2, v2))
    h = lrelu(bn(h @ w3 + b3, g3, be3, m3, v3))
    return jax.nn.sigmoid(h @ w4 + b4)[:, 0]


if __name__ == "__main__":
    key = jax.random.PRNGKey(0)
    kx, kx2, kp = jax.random.split(key, 3)

    raw_params = init_params(kp)
    packed = prepare_params(raw_params)          # one-time prep, NOT per forward

    # Small-batch check (pads to one 256-wide tile internally).
    x = jax.random.normal(kx, (BATCH, NZ), jnp.float32)
    out = f_cifar10_forward(x, packed)
    jax.block_until_ready(out)
    ref = reference_forward(x, raw_params)
    assert out.shape == (BATCH,)
    assert jnp.allclose(out, ref, atol=1e-4, rtol=1e-4), (
        f"max abs diff {jnp.max(jnp.abs(out - ref))}")

    # Multi-tile check (exercises the batched grid / VMEM-resident weights path).
    x2 = jax.random.normal(kx2, (300, NZ), jnp.float32)
    out2 = f_cifar10_forward(x2, packed)
    jax.block_until_ready(out2)
    ref2 = reference_forward(x2, raw_params)
    assert out2.shape == (300,)
    assert jnp.allclose(out2, ref2, atol=1e-4, rtol=1e-4), (
        f"max abs diff {jnp.max(jnp.abs(out2 - ref2))}")

    print("KERNEL_OK")
</pallas_src>

<mosaic_0001>
module attributes {stable_mosaic.version = 11 : i64} {
  func.func @f_cifar10_kernel(%arg0: i32, %arg1: memref<8x256xf32, #tpu.memory_space<vmem>>, %arg2: memref<112x128xf32, #tpu.memory_space<vmem>>, %arg3: memref<136x1xf32, #tpu.memory_space<vmem>>, %arg4: memref<1x256xf32, #tpu.memory_space<vmem>>) attributes {dimension_semantics = [#tpu.dimension_semantics<parallel>], iteration_bounds = array<i64: 1>, scalar_prefetch = 0 : i64, scratch_operands = 0 : i64, tpu.core_type = #tpu.core_type<tc>, window_params = [{transform_indices = @transform_0, window_bounds = array<i64: 8, 256>}, {pipeline_mode = #tpu.pipeline_mode<synchronous>, transform_indices = @transform_1, window_bounds = array<i64: 112, 128>}, {pipeline_mode = #tpu.pipeline_mode<synchronous>, transform_indices = @transform_2, window_bounds = array<i64: 136, 1>}, {transform_indices = @transform_3, window_bounds = array<i64: 1, 256>}]} {
    %c0 = arith.constant 0 : index
    %c0_0 = arith.constant 0 : index
    %0 = vector.load %arg1[%c0, %c0_0] : memref<8x256xf32, #tpu.memory_space<vmem>>, vector<8x256xf32>
    %1 = arith.mulf %0, %0 : vector<8x256xf32>
    %2 = arith.mulf %1, %0 : vector<8x256xf32>
    %3 = arith.mulf %2, %0 : vector<8x256xf32>
    %4 = arith.mulf %3, %0 : vector<8x256xf32>
    %5 = tpu.concatenate %0, %1, %2, %3, %4 in 0 : vector<8x256xf32>, vector<8x256xf32>, vector<8x256xf32>, vector<8x256xf32>, vector<8x256xf32> -> vector<40x256xf32>
    %c0_1 = arith.constant 0 : index
    %c0_2 = arith.constant 0 : index
    %6 = vector.load %arg2[%c0_1, %c0_2] : memref<112x128xf32, #tpu.memory_space<vmem>>, vector<64x40xf32>
    %cst = arith.constant dense<0.000000e+00> : vector<64x256xf32>
    %7 = tpu.matmul %6, %5, %cst {dimension_numbers = #tpu.dot_dimension_numbers<[1], [0], [0], [1], [0, 0, 1, 1], [], []>} : vector<64x40xf32>, vector<40x256xf32>, vector<64x256xf32> -> vector<64x256xf32>
    %c0_3 = arith.constant 0 : index
    %c0_4 = arith.constant 0 : index
    %8 = vector.load %arg3[%c0_3, %c0_4] : memref<136x1xf32, #tpu.memory_space<vmem>>, vector<64x1xf32>
    %9 = vector.broadcast %8 : vector<64x1xf32> to vector<64x256xf32>
    %10 = arith.addf %7, %9 : vector<64x256xf32>
    %cst_5 = arith.constant 1.000000e-01 : f32
    %11 = vector.broadcast %cst_5 : f32 to vector<64x256xf32>
    %12 = arith.mulf %11, %10 : vector<64x256xf32>
    %13 = arith.maximumf %10, %12 : vector<64x256xf32>
    %c64 = arith.constant 64 : index
    %c0_6 = arith.constant 0 : index
    %14 = vector.load %arg2[%c64, %c0_6] : memref<112x128xf32, #tpu.memory_space<vmem>>, vector<32x64xf32>
    %cst_7 = arith.constant dense<0.000000e+00> : vector<32x256xf32>
    %15 = tpu.matmul %14, %13, %cst_7 {dimension_numbers = #tpu.dot_dimension_numbers<[1], [0], [0], [1], [0, 0, 1, 1], [], []>} : vector<32x64xf32>, vector<64x256xf32>, vector<32x256xf32> -> vector<32x256xf32>
    %c64_8 = arith.constant 64 : index
    %c0_9 = arith.constant 0 : index
    %16 = vector.load %arg3[%c64_8, %c0_9] : memref<136x1xf32, #tpu.memory_space<vmem>>, vector<32x1xf32>
    %17 = vector.broadcast %16 : vector<32x1xf32> to vector<32x256xf32>
    %18 = arith.addf %15, %17 : vector<32x256xf32>
    %cst_10 = arith.constant 1.000000e-01 : f32
    %19 = vector.broadcast %cst_10 : f32 to vector<32x256xf32>
    %20 = arith.mulf %19, %18 : vector<32x256xf32>
    %21 = arith.maximumf %18, %20 : vector<32x256xf32>
    %c96 = arith.constant 96 : index
    %c0_11 = arith.constant 0 : index
    %22 = vector.load %arg2[%c96, %c0_11] : memref<112x128xf32, #tpu.memory_space<vmem>>, vector<16x32xf32>
    %cst_12 = arith.constant dense<0.000000e+00> : vector<16x256xf32>
    %23 = tpu.matmul %22, %21, %cst_12 {dimension_numbers = #tpu.dot_dimension_numbers<[1], [0], [0], [1], [0, 0, 1, 1], [], []>} : vector<16x32xf32>, vector<32x256xf32>, vector<16x256xf32> -> vector<16x256xf32>
    %c96_13 = arith.constant 96 : index
    %c0_14 = arith.constant 0 : index
    %24 = vector.load %arg3[%c96_13, %c0_14] : memref<136x1xf32, #tpu.memory_space<vmem>>, vector<16x1xf32>
    %25 = vector.broadcast %24 : vector<16x1xf32> to vector<16x256xf32>
    %26 = arith.addf %23, %25 : vector<16x256xf32>
    %cst_15 = arith.constant 1.000000e-01 : f32
    %27 = vector.broadcast %cst_15 : f32 to vector<16x256xf32>
    %28 = arith.mulf %27, %26 : vector<16x256xf32>
    %29 = arith.maximumf %26, %28 : vector<16x256xf32>
    %c112 = arith.constant 112 : index
    %c0_16 = arith.constant 0 : index
    %30 = vector.load %arg3[%c112, %c0_16] : memref<136x1xf32, #tpu.memory_space<vmem>>, vector<16x1xf32>
    %c128 = arith.constant 128 : index
    %c0_17 = arith.constant 0 : index
    %31 = vector.load %arg3[%c128, %c0_17] : memref<136x1xf32, #tpu.memory_space<vmem>>, vector<1x1xf32>
    %32 = vector.broadcast %30 : vector<16x1xf32> to vector<16x256xf32>
    %33 = arith.mulf %29, %32 : vector<16x256xf32>
    %cst_18 = arith.constant dense<0.000000e+00> : vector<256xf32>
    %34 = vector.multi_reduction <add>, %33, %cst_18 [0] : vector<16x256xf32> to vector<256xf32>
    %35 = vector.shape_cast %34 : vector<256xf32> to vector<1x256xf32>
    %36 = vector.broadcast %31 : vector<1x1xf32> to vector<1x256xf32>
    %37 = arith.addf %35, %36 : vector<1x256xf32>
    %38 = arith.negf %37 : vector<1x256xf32>
    %39 = math.exp %38 : vector<1x256xf32>
    %cst_19 = arith.constant 1.000000e+00 : f32
    %40 = vector.broadcast %cst_19 : f32 to vector<1x256xf32>
    %41 = arith.addf %40, %39 : vector<1x256xf32>
    %42 = arith.divf %40, %41 : vector<1x256xf32>
    %c0_20 = arith.constant 0 : index
    %c0_21 = arith.constant 0 : index
    %43 = vector.load %arg4[%c0_20, %c0_21] : memref<1x256xf32, #tpu.memory_space<vmem>>, vector<1x256xf32>
    tpu.vector_store %arg4[%c0_20, %c0_21], %42 {strides = array<i32>} : memref<1x256xf32, #tpu.memory_space<vmem>>, vector<1x256xf32>,
    return
  }
  func.func @transform_0(%arg0: i32) -> (i32, i32) {
    %c0_i32 = arith.constant 0 : i32
    %c0_i32_0 = arith.constant 0 : i32
    return %c0_i32, %arg0 : i32, i32
  }
  func.func @transform_1(%arg0: i32) -> (i32, i32) {
    %c0_i32 = arith.constant 0 : i32
    %c0_i32_0 = arith.constant 0 : i32
    %c0_i32_1 = arith.constant 0 : i32
    return %c0_i32, %c0_i32_0 : i32, i32
  }
  func.func @transform_2(%arg0: i32) -> (i32, i32) {
    %c0_i32 = arith.constant 0 : i32
    %c0_i32_0 = arith.constant 0 : i32
    %c0_i32_1 = arith.constant 0 : i32
    return %c0_i32, %c0_i32_0 : i32, i32
  }
  func.func @transform_3(%arg0: i32) -> (i32, i32) {
    %c0_i32 = arith.constant 0 : i32
    %c0_i32_0 = arith.constant 0 : i32
    return %c0_i32, %arg0 : i32, i32
  }
}

</mosaic_0001>

<llo_original>
// kernel: tpu_custom_call.1
$region0: #{tpu_custom_call.1}
  #allocation0 [shape = 'u32[]', space=smem, size = 0x4, offset = 0x4, fixed_abs, tag = 'smem constant byte address 0x4 - core index']
  #allocation1 [shape = 'u32[144,128]{1,0:T(1,128)}', space=vmem, size = 0x12000, scoped, tag = 'internal scratch']
  %s0 = inlined_call_operand.vmem [shape: f32[8,256], index: 0, kind: input, shape index: {}]
  %s1 = inlined_call_operand.vmem [shape: f32[112,128], index: 1, kind: input, shape index: {}]
  %s2 = inlined_call_operand.vmem [shape: f32[136,1], index: 2, kind: input, shape index: {}]
  %s3 = inlined_call_operand.hbm [shape: f32[1,256], index: 3, kind: output, shape index: {}]
  %s4 = sld [smem:[#allocation0]]
  $region22: #{tpu_custom_call.1} parent=0
    _
  %s6 = ssub.s32 1, %s4
  %s7 = scalar_select 0, %s6, %s4
  $region1: #{tpu_custom_call.1} parent=0
    #allocation2 [shape = 'u8[1024]{0}', space=vmem, size = 0x400, scoped, tag = 'output window, operand 0, single buffered']
    #allocation3 [shape = 's32[1]{0}', space=sflag, size = 0x4, scoped, tag = 'scoped memory for tpu_custom_call.1']
    %8 = vsyncpa [#allocation3], 0
    // Predicated region
    $region2: #{tpu_custom_call.1} parent=1 // pred_check
      _
    $region3: #{tpu_custom_call.1} parent=1 // pred_check_branch
      %10 = sbr.rel (0) target = $region5
    $region4: #{tpu_custom_call.1} parent=1 // pred_region
      _
    $region5: #{tpu_custom_call.1} parent=1 // pred_fallthru
      _
    // Predicated region
    $region6: #{tpu_custom_call.1} parent=1 // pred_check
      _
    $region7: #{tpu_custom_call.1} parent=1 // pred_check_branch
      %12 = sbr.rel (0) target = $region9
    $region8: #{tpu_custom_call.1} parent=1 // pred_region
      _
    $region9: #{tpu_custom_call.1} parent=1 // pred_fallthru
      _
    // Predicated region
    $region10: #{tpu_custom_call.1} parent=1 // pred_check
      _
    $region11: #{tpu_custom_call.1} parent=1 // pred_check_branch
      %14 = sbr.rel (0) target = $region13
    $region12: #{tpu_custom_call.1} parent=1 // pred_region
      _
    $region13: #{tpu_custom_call.1} parent=1 // pred_fallthru
      _
    %v15 = vld [vmem:[%s0] sm:$0xff]
    %v16 = vld [vmem:[%s0 + $0x8] sm:$0xff]
    %v17 = vmul.f32 %v15, %v15
    %v18 = vmul.f32 %v16, %v16
    %v19 = vmul.f32 %v17, %v15
    %v20 = vmul.f32 %v18, %v16
    %v21 = vmul.f32 %v19, %v15
    %v22 = vmul.f32 %v20, %v16
    %v23 = vmul.f32 %v21, %v15
    %v24 = vmul.f32 %v22, %v16
    %v25 = vld [vmem:[%s1] sm:$0xff]
    %v26 = vld [vmem:[%s1 + $0x8] sm:$0xff]
    %v27 = vld [vmem:[%s1 + $0x10] sm:$0xff]
    %v28 = vld [vmem:[%s1 + $0x18] sm:$0xff]
    %v29 = vld [vmem:[%s1 + $0x20] sm:$0xff]
    %v30 = vld [vmem:[%s1 + $0x28] sm:$0xff]
    %v31 = vld [vmem:[%s1 + $0x30] sm:$0xff]
    %v32 = vld [vmem:[%s1 + $0x38] sm:$0xff]
    %v33 = vld [vmem:[%s2] sm:$0xff]
    %v34 = vld [vmem:[%s2 + $0x8] sm:$0xff]
    %v35 = vld [vmem:[%s2 + $0x10] sm:$0xff]
    %v36 = vld [vmem:[%s2 + $0x18] sm:$0xff]
    %v37 = vld [vmem:[%s2 + $0x20] sm:$0xff]
    %v38 = vld [vmem:[%s2 + $0x28] sm:$0xff]
    %v39 = vld [vmem:[%s2 + $0x30] sm:$0xff]
    %v40 = vld [vmem:[%s2 + $0x38] sm:$0xff]
    %42 = vset.pattern.permute.xlu0 0
    %43 = vperm.xlu0 %42, %v33
    %v44 = vpop.permute.xlu0 %43
    %47 = vset.pattern.permute.xlu0 0
    %48 = vperm.xlu0 %47, %v34
    %v49 = vpop.permute.xlu0 %48
    %52 = vset.pattern.permute.xlu0 0
    %53 = vperm.xlu0 %52, %v35
    %v54 = vpop.permute.xlu0 %53
    %57 = vset.pattern.permute.xlu0 0
    %58 = vperm.xlu0 %57, %v36
    %v59 = vpop.permute.xlu0 %58
    %62 = vset.pattern.permute.xlu0 0
    %63 = vperm.xlu0 %62, %v37
    %v64 = vpop.permute.xlu0 %63
    %67 = vset.pattern.permute.xlu0 0
    %68 = vperm.xlu0 %67, %v38
    %v69 = vpop.permute.xlu0 %68
    %72 = vset.pattern.permute.xlu0 0
    %73 = vperm.xlu0 %72, %v39
    %v74 = vpop.permute.xlu0 %73
    %77 = vset.pattern.permute.xlu0 0
    %78 = vperm.xlu0 %77, %v40
    %v79 = vpop.permute.xlu0 %78
    %vm81 = vcmask 326656
    %v83 = vsel %vm81, %v25, 0
    %v86 = vsel %vm81, %v26, 0
    %v89 = vsel %vm81, %v27, 0
    %v92 = vsel %vm81, %v28, 0
    %v95 = vsel %vm81, %v29, 0
    %v98 = vsel %vm81, %v30, 0
    %v101 = vsel %vm81, %v31, 0
    %v104 = vsel %vm81, %v32, 0
    %106 = vmatprep.subr.mxu0 %v16
    %107 = vmatpush1.msra.mxu0 %v15
    %108 = vmatprep.subr.mxu0 %v18
    %109 = vmatpush1.msra.mxu0 %v17
    %110 = vmatprep.subr.mxu0 %v20
    %111 = vmatpush1.msra.mxu0 %v19
    %112 = vmatprep.subr.mxu0 %v22
    %113 = vmatpush1.msra.mxu0 %v21
    %114 = vmatprep.subr.mxu0 %v24
    %115 = vmatpush1.msra.mxu0 %v23
    %116 = vmatprep.subr.mxu0 0.0
    %117 = vmatpush1.msra.mxu0 0.0
    %118 = vmatprep.subr.mxu0 0.0
    %119 = vmatpush1.msra.mxu0 0.0
    %120 = vmatprep.subr.mxu0 0.0
    %121 = vmatpush1.msra.mxu0 0.0
    %122 = vmatprep.subr.mxu0 0.0
    %123 = vmatpush1.msra.mxu0 0.0
    %124 = vmatprep.subr.mxu0 0.0
    %125 = vmatpush1.msra.mxu0 0.0
    %126 = vmatprep.subr.mxu0 0.0
    %127 = vmatpush1.msra.mxu0 0.0
    %128 = vmatprep.subr.mxu0 0.0
    %129 = vmatpush1.msra.mxu0 0.0
    %130 = vmatprep.subr.mxu0 0.0
    %131 = vmatpush1.msra.mxu0 0.0
    %132 = vmatprep.subr.mxu0 0.0
    %133 = vmatpush1.msra.mxu0 0.0
    %134 = vmatprep.subr.mxu0 0.0
    %135 = vmatpush1.msra.mxu0 0.0
    %136 = vmatprep.subr.mxu0 0.0
    %137 = vmatpush1.msra.mxu0 0.0
    %138 = vmatprep.subr.mxu0 0.0
    %139 = vmatpush1.msra.mxu0 0.0
    %140 = vmatprep.subr.mxu0 0.0
    %141 = vmatpush1.msra.mxu0 0.0
    %142 = vmatprep.subr.mxu0 0.0
    %143 = vmatpush1.msra.mxu0 0.0
    %144 = vmatprep.subr.mxu0 0.0
    %145 = vmatpush1.msra.mxu0 0.0
    %146 = vmatprep.subr.mxu0 0.0
    %147 = vmatpush1.msra.mxu0 0.0
    %148 = vmatprep.subr.mxu0 0.0
    %149 = vmatpush1.msra.mxu0 0.0
    %150 = vmatprep.subr.mxu0 0.0
    %151 = vmatpush1.msra.mxu0 0.0
    %152 = vmatprep.subr.mxu0 0.0
    %153 = vmatpush1.msra.mxu0 0.0
    %154 = vmatprep.subr.mxu0 0.0
    %155 = vmatpush1.msra.mxu0 0.0
    %156 = vmatprep.subr.mxu0 0.0
    %157 = vmatpush1.msra.mxu0 0.0
    %158 = vmatprep.subr.mxu0 0.0
    %159 = vmatpush1.msra.mxu0 0.0
    %160 = vmatprep.subr.mxu0 0.0
    %161 = vmatpush1.msra.mxu0 0.0
    %162 = vmatprep.subr.mxu0 0.0
    %163 = vmatpush1.msra.mxu0 0.0
    %164 = vmatprep.subr.mxu0 0.0
    %165 = vmatpush1.msra.mxu0 0.0
    %166 = vmatprep.subr.mxu0 0.0
    %167 = vmatpush1.msra.mxu0 0.0
    %168 = vmatprep.subr.mxu0 0.0
    %169 = vmatpush1.msra.mxu0 0.0
    %170 = vmatprep.mubr.f32.mxu0 0.0
    %171 = vmatmul.mubr.f32.gmra.mrb[0].mxu0 %v83
    %v172 = vpop.f32.mrb[0].mxu0
    %v173 = vadd.f32 %v44, %v172
    %v174 = vpop.f32.mrb[0].mxu0
    %v175 = vadd.f32 %v44, %v174
    %176 = vmatprep.mubr.f32.mxu0 0.0
    %177 = vmatmul.mubr.f32.gmra.mrb[0].mxu0 %v86
    %v178 = vpop.f32.mrb[0].mxu0
    %v179 = vadd.f32 %v49, %v178
    %v180 = vpop.f32.mrb[0].mxu0
    %v181 = vadd.f32 %v49, %v180
    %182 = vmatprep.mubr.f32.mxu0 0.0
    %183 = vmatmul.mubr.f32.gmra.mrb[0].mxu0 %v89
    %v184 = vpop.f32.mrb[0].mxu0
    %v185 = vadd.f32 %v54, %v184
    %v186 = vpop.f32.mrb[0].mxu0
    %v187 = vadd.f32 %v54, %v186
    %188 = vmatprep.mubr.f32.mxu0 0.0
    %189 = vmatmul.mubr.f32.gmra.mrb[0].mxu0 %v92
    %v190 = vpop.f32.mrb[0].mxu0
    %v191 = vadd.f32 %v59, %v190
    %v192 = vpop.f32.mrb[0].mxu0
    %v193 = vadd.f32 %v59, %v192
    %194 = vmatprep.mubr.f32.mxu0 0.0
    %195 = vmatmul.mubr.f32.gmra.mrb[0].mxu0 %v95
    %v196 = vpop.f32.mrb[0].mxu0
    %v197 = vadd.f32 %v64, %v196
    %v198 = vpop.f32.mrb[0].mxu0
    %v199 = vadd.f32 %v64, %v198
    %200 = vmatprep.mubr.f32.mxu0 0.0
    %201 = vmatmul.mubr.f32.gmra.mrb[0].mxu0 %v98
    %v202 = vpop.f32.mrb[0].mxu0
    %v203 = vadd.f32 %v69, %v202
    %v204 = vpop.f32.mrb[0].mxu0
    %v205 = vadd.f32 %v69, %v204
    %206 = vmatprep.mubr.f32.mxu0 0.0
    %207 = vmatmul.mubr.f32.gmra.mrb[0].mxu0 %v101
    %v208 = vpop.f32.mrb[0].mxu0
    %v209 = vadd.f32 %v74, %v208
    %v210 = vpop.f32.mrb[0].mxu0
    %v211 = vadd.f32 %v74, %v210
    %212 = vmatprep.mubr.f32.mxu0 0.0
    %213 = vmatmul.mubr.f32.gmra.mrb[0].mxu0 %v104
    %v214 = vpop.f32.mrb[0].mxu0
    %v215 = vadd.f32 %v79, %v214
    %v216 = vpop.f32.mrb[0].mxu0
    %v217 = vadd.f32 %v79, %v216
    %218 = vdwg.mxu0
    %v219 = vmul.f32 %v173, 0.1
    %v220 = vmul.f32 %v175, 0.1
    %v221 = vmul.f32 %v179, 0.1
    %v222 = vmul.f32 %v181, 0.1
    %v223 = vmul.f32 %v185, 0.1
    %v224 = vmul.f32 %v187, 0.1
    %v225 = vmul.f32 %v191, 0.1
    %v226 = vmul.f32 %v193, 0.1
    %v227 = vmul.f32 %v197, 0.1
    %v228 = vmul.f32 %v199, 0.1
    %v229 = vmul.f32 %v203, 0.1
    %v230 = vmul.f32 %v205, 0.1
    %v231 = vmul.f32 %v209, 0.1
    %v232 = vmul.f32 %v211, 0.1
    %v233 = vmul.f32 %v215, 0.1
    %v234 = vmul.f32 %v217, 0.1
    %v235 = vmax.f32 %v173, %v219
    %v236 = vmax.f32 %v175, %v220
    %v237 = vmax.f32 %v179, %v221
    %v238 = vmax.f32 %v181, %v222
    %v239 = vmax.f32 %v185, %v223
    %v240 = vmax.f32 %v187, %v224
    %v241 = vmax.f32 %v191, %v225
    %v242 = vmax.f32 %v193, %v226
    %v243 = vmax.f32 %v197, %v227
    %v244 = vmax.f32 %v199, %v228
    %v245 = vmax.f32 %v203, %v229
    %v246 = vmax.f32 %v205, %v230
    %v247 = vmax.f32 %v209, %v231
    %v248 = vmax.f32 %v211, %v232
    %v249 = vmax.f32 %v215, %v233
    %v250 = vmax.f32 %v217, %v234
    %v251 = vld [vmem:[%s1 + $0x40] sm:$0xff]
    %v252 = vld [vmem:[%s1 + $0x48] sm:$0xff]
    %v253 = vld [vmem:[%s1 + $0x50] sm:$0xff]
    %v254 = vld [vmem:[%s1 + $0x58] sm:$0xff]
    %v255 = vld [vmem:[%s2 + $0x40] sm:$0xff]
    %v256 = vld [vmem:[%s2 + $0x48] sm:$0xff]
    %v257 = vld [vmem:[%s2 + $0x50] sm:$0xff]
    %v258 = vld [vmem:[%s2 + $0x58] sm:$0xff]
    %260 = vset.pattern.permute.xlu0 0
    %261 = vperm.xlu0 %260, %v255
    %v262 = vpop.permute.xlu0 %261
    %265 = vset.pattern.permute.xlu0 0
    %266 = vperm.xlu0 %265, %v256
    %v267 = vpop.permute.xlu0 %266
    %270 = vset.pattern.permute.xlu0 0
    %271 = vperm.xlu0 %270, %v257
    %v272 = vpop.permute.xlu0 %271
    %275 = vset.pattern.permute.xlu0 0
    %276 = vperm.xlu0 %275, %v258
    %v277 = vpop.permute.xlu0 %276
    %vm279 = vcmask 523264
    %v281 = vsel %vm279, %v251, 0
    %v284 = vsel %vm279, %v252, 0
    %v287 = vsel %vm279, %v253, 0
    %v290 = vsel %vm279, %v254, 0
    %292 = vmatprep.subr.mxu0 %v236
    %293 = vmatpush1.msra.mxu0 %v235
    %294 = vmatprep.subr.mxu0 %v238
    %295 = vmatpush1.msra.mxu0 %v237
    %296 = vmatprep.subr.mxu0 %v240
    %297 = vmatpush1.msra.mxu0 %v239
    %298 = vmatprep.subr.mxu0 %v242
    %299 = vmatpush1.msra.mxu0 %v241
    %300 = vmatprep.subr.mxu0 %v244
    %301 = vmatpush1.msra.mxu0 %v243
    %302 = vmatprep.subr.mxu0 %v246
    %303 = vmatpush1.msra.mxu0 %v245
    %304 = vmatprep.subr.mxu0 %v248
    %305 = vmatpush1.msra.mxu0 %v247
    %306 = vmatprep.subr.mxu0 %v250
    %307 = vmatpush1.msra.mxu0 %v249
    %308 = vmatprep.subr.mxu0 0.0
    %309 = vmatpush1.msra.mxu0 0.0
    %310 = vmatprep.subr.mxu0 0.0
    %311 = vmatpush1.msra.mxu0 0.0
    %312 = vmatprep.subr.mxu0 0.0
    %313 = vmatpush1.msra.mxu0 0.0
    %314 = vmatprep.subr.mxu0 0.0
    %315 = vmatpush1.msra.mxu0 0.0
    %316 = vmatprep.subr.mxu0 0.0
    %317 = vmatpush1.msra.mxu0 0.0
    %318 = vmatprep.subr.mxu0 0.0
    %319 = vmatpush1.msra.mxu0 0.0
    %320 = vmatprep.subr.mxu0 0.0
    %321 = vmatpush1.msra.mxu0 0.0
    %322 = vmatprep.subr.mxu0 0.0
    %323 = vmatpush1.msra.mxu0 0.0
    %324 = vmatprep.subr.mxu0 0.0
    %325 = vmatpush1.msra.mxu0 0.0
    %326 = vmatprep.subr.mxu0 0.0
    %327 = vmatpush1.msra.mxu0 0.0
    %328 = vmatprep.subr.mxu0 0.0
    %329 = vmatpush1.msra.mxu0 0.0
    %330 = vmatprep.subr.mxu0 0.0
    %331 = vmatpush1.msra.mxu0 0.0
    %332 = vmatprep.subr.mxu0 0.0
    %333 = vmatpush1.msra.mxu0 0.0
    %334 = vmatprep.subr.mxu0 0.0
    %335 = vmatpush1.msra.mxu0 0.0
    %336 = vmatprep.subr.mxu0 0.0
    %337 = vmatpush1.msra.mxu0 0.0
    %338 = vmatprep.subr.mxu0 0.0
    %339 = vmatpush1.msra.mxu0 0.0
    %340 = vmatprep.subr.mxu0 0.0
    %341 = vmatpush1.msra.mxu0 0.0
    %342 = vmatprep.subr.mxu0 0.0
    %343 = vmatpush1.msra.mxu0 0.0
    %344 = vmatprep.subr.mxu0 0.0
    %345 = vmatpush1.msra.mxu0 0.0
    %346 = vmatprep.subr.mxu0 0.0
    %347 = vmatpush1.msra.mxu0 0.0
    %348 = vmatprep.subr.mxu0 0.0
    %349 = vmatpush1.msra.mxu0 0.0
    %350 = vmatprep.subr.mxu0 0.0
    %351 = vmatpush1.msra.mxu0 0.0
    %352 = vmatprep.subr.mxu0 0.0
    %353 = vmatpush1.msra.mxu0 0.0
    %354 = vmatprep.subr.mxu0 0.0
    %355 = vmatpush1.msra.mxu0 0.0
    %356 = vmatprep.mubr.f32.mxu0 0.0
    %357 = vmatmul.mubr.f32.gmra.mrb[0].mxu0 %v281
    %v358 = vpop.f32.mrb[0].mxu0
    %v359 = vadd.f32 %v262, %v358
    %v360 = vpop.f32.mrb[0].mxu0
    %v361 = vadd.f32 %v262, %v360
    %362 = vmatprep.mubr.f32.mxu0 0.0
    %363 = vmatmul.mubr.f32.gmra.mrb[0].mxu0 %v284
    %v364 = vpop.f32.mrb[0].mxu0
    %v365 = vadd.f32 %v267, %v364
    %v366 = vpop.f32.mrb[0].mxu0
    %v367 = vadd.f32 %v267, %v366
    %368 = vmatprep.mubr.f32.mxu0 0.0
    %369 = vmatmul.mubr.f32.gmra.mrb[0].mxu0 %v287
    %v370 = vpop.f32.mrb[0].mxu0
    %v371 = vadd.f32 %v272, %v370
    %v372 = vpop.f32.mrb[0].mxu0
    %v373 = vadd.f32 %v272, %v372
    %374 = vmatprep.mubr.f32.mxu0 0.0
    %375 = vmatmul.mubr.f32.gmra.mrb[0].mxu0 %v290
    %v376 = vpop.f32.mrb[0].mxu0
    %v377 = vadd.f32 %v277, %v376
    %v378 = vpop.f32.mrb[0].mxu0
    %v379 = vadd.f32 %v277, %v378
    %380 = vdwg.mxu0
    %v381 = vmul.f32 %v359, 0.1
    %v382 = vmul.f32 %v361, 0.1
    %v383 = vmul.f32 %v365, 0.1
    %v384 = vmul.f32 %v367, 0.1
    %v385 = vmul.f32 %v371, 0.1
    %v386 = vmul.f32 %v373, 0.1
    %v387 = vmul.f32 %v377, 0.1
    %v388 = vmul.f32 %v379, 0.1
    %v389 = vmax.f32 %v359, %v381
    %v390 = vmax.f32 %v361, %v382
    %v391 = vmax.f32 %v365, %v383
    %v392 = vmax.f32 %v367, %v384
    %v393 = vmax.f32 %v371, %v385
    %v394 = vmax.f32 %v373, %v386
    %v395 = vmax.f32 %v377, %v387
    %v396 = vmax.f32 %v379, %v388
    %v397 = vld [vmem:[%s1 + $0x60] sm:$0xff]
    %v398 = vld [vmem:[%s1 + $0x68] sm:$0xff]
    %v399 = vld [vmem:[%s2 + $0x60] sm:$0xff]
    %v400 = vld [vmem:[%s2 + $0x68] sm:$0xff]
    %402 = vset.pattern.permute.xlu0 0
    %403 = vperm.xlu0 %402, %v399
    %v404 = vpop.permute.xlu0 %403
    %407 = vset.pattern.permute.xlu0 0
    %408 = vperm.xlu0 %407, %v400
    %v409 = vpop.permute.xlu0 %408
    %vm411 = vcmask 261120
    %v413 = vsel %vm411, %v397, 0
    %v416 = vsel %vm411, %v398, 0
    %418 = vmatprep.subr.mxu0 %v390
    %419 = vmatpush1.msra.mxu0 %v389
    %420 = vmatprep.subr.mxu0 %v392
    %421 = vmatpush1.msra.mxu0 %v391
    %422 = vmatprep.subr.mxu0 %v394
    %423 = vmatpush1.msra.mxu0 %v393
    %424 = vmatprep.subr.mxu0 %v396
    %425 = vmatpush1.msra.mxu0 %v395
    %426 = vmatprep.subr.mxu0 0.0
    %427 = vmatpush1.msra.mxu0 0.0
    %428 = vmatprep.subr.mxu0 0.0
    %429 = vmatpush1.msra.mxu0 0.0
    %430 = vmatprep.subr.mxu0 0.0
    %431 = vmatpush1.msra.mxu0 0.0
    %432 = vmatprep.subr.mxu0 0.0
    %433 = vmatpush1.msra.mxu0 0.0
    %434 = vmatprep.subr.mxu0 0.0
    %435 = vmatpush1.msra.mxu0 0.0
    %436 = vmatprep.subr.mxu0 0.0
    %437 = vmatpush1.msra.mxu0 0.0
    %438 = vmatprep.subr.mxu0 0.0
    %439 = vmatpush1.msra.mxu0 0.0
    %440 = vmatprep.subr.mxu0 0.0
    %441 = vmatpush1.msra.mxu0 0.0
    %442 = vmatprep.subr.mxu0 0.0
    %443 = vmatpush1.msra.mxu0 0.0
    %444 = vmatprep.subr.mxu0 0.0
    %445 = vmatpush1.msra.mxu0 0.0
    %446 = vmatprep.subr.mxu0 0.0
    %447 = vmatpush1.msra.mxu0 0.0
    %448 = vmatprep.subr.mxu0 0.0
    %449 = vmatpush1.msra.mxu0 0.0
    %450 = vmatprep.subr.mxu0 0.0
    %451 = vmatpush1.msra.mxu0 0.0
    %452 = vmatprep.subr.mxu0 0.0
    %453 = vmatpush1.msra.mxu0 0.0
    %454 = vmatprep.subr.mxu0 0.0
    %455 = vmatpush1.msra.mxu0 0.0
    %456 = vmatprep.subr.mxu0 0.0
    %457 = vmatpush1.msra.mxu0 0.0
    %458 = vmatprep.subr.mxu0 0.0
    %459 = vmatpush1.msra.mxu0 0.0
    %460 = vmatprep.subr.mxu0 0.0
    %461 = vmatpush1.msra.mxu0 0.0
    %462 = vmatprep.subr.mxu0 0.0
    %463 = vmatpush1.msra.mxu0 0.0
    %464 = vmatprep.subr.mxu0 0.0
    %465 = vmatpush1.msra.mxu0 0.0
    %466 = vmatprep.subr.mxu0 0.0
    %467 = vmatpush1.msra.mxu0 0.0
    %468 = vmatprep.subr.mxu0 0.0
    %469 = vmatpush1.msra.mxu0 0.0
    %470 = vmatprep.subr.mxu0 0.0
    %471 = vmatpush1.msra.mxu0 0.0
    %472 = vmatprep.subr.mxu0 0.0
    %473 = vmatpush1.msra.mxu0 0.0
    %474 = vmatprep.subr.mxu0 0.0
    %475 = vmatpush1.msra.mxu0 0.0
    %476 = vmatprep.subr.mxu0 0.0
    %477 = vmatpush1.msra.mxu0 0.0
    %478 = vmatprep.subr.mxu0 0.0
    %479 = vmatpush1.msra.mxu0 0.0
    %480 = vmatprep.subr.mxu0 0.0
    %481 = vmatpush1.msra.mxu0 0.0
    %482 = vmatprep.mubr.f32.mxu0 0.0
    %483 = vmatmul.mubr.f32.gmra.mrb[0].mxu0 %v413
    %v484 = vpop.f32.mrb[0].mxu0
    %v485 = vadd.f32 %v404, %v484
    %v486 = vpop.f32.mrb[0].mxu0
    %v487 = vadd.f32 %v404, %v486
    %488 = vmatprep.mubr.f32.mxu0 0.0
    %489 = vmatmul.mubr.f32.gmra.mrb[0].mxu0 %v416
    %v490 = vpop.f32.mrb[0].mxu0
    %v491 = vadd.f32 %v409, %v490
    %v492 = vpop.f32.mrb[0].mxu0
    %v493 = vadd.f32 %v409, %v492
    %494 = vdwg.mxu0
    %v495 = vmul.f32 %v485, 0.1
    %v496 = vmul.f32 %v487, 0.1
    %v497 = vmul.f32 %v491, 0.1
    %v498 = vmul.f32 %v493, 0.1
    %v499 = vmax.f32 %v485, %v495
    %v500 = vmax.f32 %v487, %v496
    %v501 = vmax.f32 %v491, %v497
    %v502 = vmax.f32 %v493, %v498
    %v503 = vld [vmem:[%s2 + $0x70] sm:$0xff]
    %v504 = vld [vmem:[%s2 + $0x78] sm:$0xff]
    %v505 = vld [vmem:[%s2 + $0x80] sm:$0x1]
    %507 = vset.pattern.permute.xlu0 0
    %508 = vperm.xlu0 %507, %v503
    %v509 = vpop.permute.xlu0 %508
    %512 = vset.pattern.permute.xlu0 0
    %513 = vperm.xlu0 %512, %v504
    %v514 = vpop.permute.xlu0 %513
    %v516 = vmul.f32 %v499, %v509
    %v517 = vmul.f32 %v500, %v509
    %v518 = vmul.f32 %v501, %v514
    %v519 = vmul.f32 %v502, %v514
    %v520 = vadd.f32 %v516, %v518
    %v521 = vrot.slane %v520, 4
    %v522 = vadd.f32 %v520, %v521
    %v523 = vrot.slane %v522, 2
    %v524 = vadd.f32 %v522, %v523
    %v525 = vrot.slane %v524, 1
    %v526 = vadd.f32 %v524, %v525
    %v527 = vadd.f32 %v517, %v519
    %v528 = vrot.slane %v527, 4
    %v529 = vadd.f32 %v527, %v528
    %v530 = vrot.slane %v529, 2
    %v531 = vadd.f32 %v529, %v530
    %v532 = vrot.slane %v531, 1
    %v533 = vadd.f32 %v531, %v532
    %535 = vset.pattern.permute.xlu0 0
    %536 = vperm.xlu0 %535, %v505
    %v537 = vpop.permute.xlu0 %536
    %v539 = vadd.f32 %v526, %v537
    %v540 = vadd.f32 %v533, %v537
    %v541 = vxor.u32 %v539, 2147483648
    %v542 = vxor.u32 %v540, 2147483648
    %v543 = vmul.f32 %v541, 1.442695
    %v544 = vpow.pop %v543
    %v545 = vmul.f32 %v542, 1.442695
    %v546 = vpow.pop %v545
    %v547 = vadd.f32 %v544, 1.0
    %v548 = vadd.f32 %v546, 1.0
    %v549 = vrcp.pop %v547
    %v550 = vmul.f32 1.0, %v549
    %v551 = vrcp.pop %v548
    %v552 = vmul.f32 1.0, %v551
    %v555 = vcombine.low %v550, %v552
    %v557 = vunpack.c.l.s4 1966171168
    %v558 = vunpack.c.0.s8 %v557
    %v559 = vlaneseq
    %v560 = vshrl.u32 %v559, 7
    %v561 = vsub.s32 %v558, %v560
    %v562 = vrot.slane %v555, %v561
    %v564 = vunpack.c.l.s4 1966171168
    %v565 = vunpack.c.0.s8 %v564
    %v566 = vlaneseq
    %v567 = vshrl.u32 %v566, 7
    %v568 = vsub.s32 %v565, %v567
    %v569 = vrot.slane %v562, %v568
    %v571 = vlaneseq
    %vm572 = vcmp.ge.s32.totalorder %v571, 0
    %vm573 = vcmp.lt.s32.totalorder %v571, 256
    %vm574 = vmand %vm572, %vm573
    %575 = vst.msk [vmem:[#allocation2] sm:$0x3] %vm574, %v569
    // Predicated region
    $region14: #{tpu_custom_call.1} parent=1 // pred_check
      _
    $region15: #{tpu_custom_call.1} parent=1 // pred_check_branch
      %577 = sbr.rel (0) target = $region17
    $region16: #{tpu_custom_call.1} parent=1 // pred_region
      %s579 = ssub.s32 32, 32
      %580 = vsyncadd [#allocation3], %s579
      %s582 = sshll.u32 [#allocation2], 4
      %s583 = int_to_ptr.vmem [resolvable:$true] %s582
      %585 = dma.vmem_to_hbm [thread:$0]  %s583, 32, %s3, [#allocation3]
    $region17: #{tpu_custom_call.1} parent=1 // pred_fallthru
      _
    // Predicated region
    $region18: #{tpu_custom_call.1} parent=1 // pred_check
      _
    $region19: #{tpu_custom_call.1} parent=1 // pred_check_branch
      %587 = sbr.rel (0) target = $region21
    $region20: #{tpu_custom_call.1} parent=1 // pred_region
      %588 = dma.done [#allocation3], 32
    $region21: #{tpu_custom_call.1} parent=1 // pred_fallthru
      _
    %589 = vsyncpa [#allocation3], 1

</llo_original>
